<compile_context>
chip_gen: v5e
topology: v5e:2x2
jax: 0.10.0
libtpu: 0.0.40
codegen_flags: <defaults>
</compile_context>

<pallas_src>
import math
import functools

import jax
import jax.numpy as jnp
from jax import lax
from jax.experimental import pallas as pl
from jax.experimental.pallas import tpu as pltpu


# ---------------------------------------------------------------------------
# Fused Pallas kernel: in-proj -> multi-head attention -> out-proj, per batch.
# ---------------------------------------------------------------------------

def _fused_qmha_kernel(*refs, H, D, E, need_weights):
    # refs (need_weights=True):
    #   x_ref     (L, E)   one batch of the (batch-major) input
    #   w_in_ref  (E, 3E)  pre-transposed packed in-proj weight (scale folded in)
    #   b_in_ref  (1, 3E)  packed in-proj bias (scale folded into q part)
    #   w_out_ref (E, E)   pre-transposed out-proj weight
    #   b_out_ref (1, E)   out-proj bias
    #   out_ref   (L, E)   attention output for this batch
    #   attn_ref  (L, L)   head-averaged attention weights (only if need_weights)
    if need_weights:
        x_ref, w_in_ref, b_in_ref, w_out_ref, b_out_ref, out_ref, attn_ref = refs
    else:
        x_ref, w_in_ref, b_in_ref, w_out_ref, b_out_ref, out_ref = refs
        attn_ref = None

    x = x_ref[...]
    # Packed in-projection: (L, E) @ (E, 3E) + b -> (L, 3E), fp32 accumulation.
    # 1/sqrt(D) is already folded into the Q columns of w_in / b_in.
    qkv = jnp.dot(x, w_in_ref[...], preferred_element_type=jnp.float32) + b_in_ref[...]

    out_acc = jnp.zeros(out_ref.shape, jnp.float32)               # (L, E)
    attn_acc = jnp.zeros(attn_ref.shape, jnp.float32) if need_weights else None

    # Heads are static lane slices of the packed projection -> unrolled loop,
    # no per-head grid steps, no in-kernel operand transposes.
    for h in range(H):
        lo = h * D
        q_h = qkv[:, lo:lo + D]                                   # (L, D) pre-scaled
        k_h = qkv[:, E + lo:E + lo + D]                           # (L, D)
        v_h = qkv[:, 2 * E + lo:2 * E + lo + D]                   # (L, D)

        # s = q_h @ k_h^T without materializing a transpose: contract last dims.
        s = lax.dot_general(q_h, k_h, (((1,), (1,)), ((), ())),
                            preferred_element_type=jnp.float32)   # (L, L)
        s = s - jnp.max(s, axis=-1, keepdims=True)
        p = jnp.exp(s)                                            # unnormalized probs
        denom = jnp.sum(p, axis=-1, keepdims=True)                # (L, 1)

        # Normalize on the (L, D) context instead of the (L, L) probabilities;
        # the approximate EUP reciprocal stays on the compute path only.
        ctx_h = jnp.dot(p, v_h, preferred_element_type=jnp.float32)
        ctx_h = ctx_h * pl.reciprocal(denom, approx=True)         # (L, D)

        # Per-head out-projection accumulation (replaces the ctx concatenate).
        out_acc = out_acc + jnp.dot(ctx_h, w_out_ref[lo:lo + D, :],
                                    preferred_element_type=jnp.float32)

        if need_weights:
            # Exact normalization for the user-visible weights (rows sum to 1).
            attn_acc = attn_acc + p / denom

    out_ref[...] = (out_acc + b_out_ref[...]).astype(out_ref.dtype)
    if need_weights:
        # Single store of the head-averaged weights (one multiply, no per-head RMW).
        attn_ref[...] = (attn_acc * (1.0 / H)).astype(attn_ref.dtype)


def fused_qmha(x_nle, w_in_t, b_in2, w_out_t, b_out2, num_heads, need_weights):
    """x_nle: (N, L, E) batch-major input.

    Returns (N,L,E) output and, if need_weights, (N,L,L) head-averaged weights.
    """
    N, L, E = x_nle.shape
    H = num_heads
    D = E // H
    kern = functools.partial(_fused_qmha_kernel, H=H, D=D, E=E,
                             need_weights=need_weights)

    if need_weights:
        out_shape = (jax.ShapeDtypeStruct((N, L, E), x_nle.dtype),
                     jax.ShapeDtypeStruct((N, L, L), jnp.float32))
        out_specs = (pl.BlockSpec((None, L, E), lambda n: (n, 0, 0)),
                     pl.BlockSpec((None, L, L), lambda n: (n, 0, 0)))
    else:
        out_shape = jax.ShapeDtypeStruct((N, L, E), x_nle.dtype)
        out_specs = pl.BlockSpec((None, L, E), lambda n: (n, 0, 0))

    # NOTE(perf): the weight/bias BlockSpecs have constant index_maps, so the
    # blocks are DMA'd once and stay resident across grid steps.  For large E
    # on v7x (64 MiB VMEM) single-buffer them (pipeline_mode=pl.Buffered(1))
    # and/or tile the 3E / E weight columns on an extra grid axis.
    return pl.pallas_call(
        kern,
        out_shape=out_shape,
        grid=(N,),
        in_specs=[
            pl.BlockSpec((None, L, E), lambda n: (n, 0, 0)),   # x: one batch per step
            pl.BlockSpec((E, 3 * E), lambda n: (0, 0)),        # shared weights/biases
            pl.BlockSpec((1, 3 * E), lambda n: (0, 0)),
            pl.BlockSpec((E, E), lambda n: (0, 0)),
            pl.BlockSpec((1, E), lambda n: (0, 0)),
        ],
        out_specs=out_specs,
        # Batch axis is independent -> "parallel" (v7x megacore: one batch per TC).
        compiler_params=pltpu.CompilerParams(dimension_semantics=("parallel",)),
    )(x_nle, w_in_t, b_in2, w_out_t, b_out2)


# ---------------------------------------------------------------------------
# Parameter construction (plain JAX glue)
# ---------------------------------------------------------------------------

def construct_matrix(r, i, j, k):
    # qytorch's _construct_matrix: standard Hamilton-product block matrix.
    return jnp.concatenate(
        [
            jnp.concatenate([r, -i, -j, -k], axis=1),
            jnp.concatenate([i, r, -k, j], axis=1),
            jnp.concatenate([j, k, r, -i], axis=1),
            jnp.concatenate([k, -j, i, r], axis=1),
        ],
        axis=0,
    )


def init_params(key, embed_dim):
    """Deterministic synthetic init mirroring QMultiheadAttention.__init__ /
    _reset_parameters (self-attention path: _qkv_same_embed_dim=True, bias=True)."""
    e4 = embed_dim // 4
    shape = (3 * e4, e4)                                 # r/i/j/k in_proj component weights
    bound = math.sqrt(6.0 / (shape[0] + shape[1]))       # xavier_uniform_
    keys = jax.random.split(key, 5)
    r, i, j, k = (
        jax.random.uniform(keys[t], shape, jnp.float32, -bound, bound) for t in range(4)
    )
    w_in = construct_matrix(r, i, j, k)                  # (3E, E)
    b_in = jnp.zeros((3 * embed_dim,), jnp.float32)      # constant_(in_proj_bias, 0)
    lim = 1.0 / math.sqrt(embed_dim)                     # out_proj keeps default Linear init
    w_out = jax.random.uniform(keys[4], (embed_dim, embed_dim), jnp.float32, -lim, lim)
    b_out = jnp.zeros((embed_dim,), jnp.float32)         # constant_(out_proj.bias, 0)
    return w_in, b_in, w_out, b_out


def prepare_params(params, num_heads):
    """One-time static weight transform for the kernel:
    pre-transpose, and fold the 1/sqrt(head_dim) softmax scale into the
    Q columns of the packed in-projection weight/bias."""
    w_in, b_in, w_out, b_out = params
    E = w_out.shape[0]
    D = E // num_heads
    scale = 1.0 / math.sqrt(D)
    qscale = jnp.concatenate([jnp.full((E,), scale, w_in.dtype),
                              jnp.ones((2 * E,), w_in.dtype)])    # scale q, not k/v
    w_in_t = jnp.transpose(w_in) * qscale[None, :]                # (E, 3E)
    b_in2 = (b_in * qscale).reshape(1, 3 * E)                     # (1, 3E)
    w_out_t = jnp.transpose(w_out)                                # (E, E)
    b_out2 = b_out.reshape(1, E)                                  # (1, E)
    return w_in_t, b_in2, w_out_t, b_out2


# ---------------------------------------------------------------------------
# Forward pass (thin wrapper: layout plumbing + one fused pallas_call)
# ---------------------------------------------------------------------------

def qmha_forward(query, key, value, prepared_params, num_heads, need_weights=True):
    # Replicates F.multi_head_attention_forward (eval mode, no masks, dropout=0,
    # average_attn_weights=True) with the quaternion in_proj weight.
    del key, value                                       # self-attention: query is key is value
    w_in_t, b_in2, w_out_t, b_out2 = prepared_params
    L, N, E = query.shape

    # Batch-major layout for the kernel (last two dims = full (L, E) tiles).
    # A squeezed-batch BlockSpec on (L,N,E) would avoid this transpose but puts
    # a size-1 block on the second-minor dim (N=2), violating the (8,128)/full
    # block-shape rule -> keep the explicit transpose (tiny activation here).
    x_nle = jnp.transpose(query, (1, 0, 2))              # (N, L, E)

    if need_weights:
        out_nle, attn_w = fused_qmha(x_nle, w_in_t, b_in2, w_out_t, b_out2,
                                     num_heads, True)
    else:
        out_nle = fused_qmha(x_nle, w_in_t, b_in2, w_out_t, b_out2,
                             num_heads, False)
        attn_w = None

    out = jnp.transpose(out_nle, (1, 0, 2))              # back to (L, N, E)
    return out, attn_w


def reference_forward(query, params, num_heads):
    # Pure-JAX reference for validation.
    w_in, b_in, w_out, b_out = params
    L, N, E = query.shape
    H = num_heads
    D = E // H
    qkv = query @ w_in.T + b_in
    q, k, v = jnp.split(qkv, 3, axis=-1)

    def to_heads(t):
        return jnp.transpose(t.reshape(L, N, H, D), (1, 2, 0, 3))

    q, k, v = to_heads(q), to_heads(k), to_heads(v)
    s = jnp.einsum("nhld,nhmd->nhlm", q / math.sqrt(D), k)
    p = jax.nn.softmax(s, axis=-1)
    ctx = jnp.einsum("nhlm,nhmd->nhld", p, v)
    ctx = jnp.transpose(ctx, (2, 0, 1, 3)).reshape(L, N, E)
    out = ctx @ w_out.T + b_out
    return out, p.mean(axis=1)


# TODO(synk): torch fast-path dispatch (_native_multi_head_attention), nested tensors,
# masks (None in this config) and dropout (p=0.0 / eval) are control-flow-only and
# not replicated.

if __name__ == "__main__":
    embed_dim, num_heads = 32, 4      # head_dim = 8, embed_dim divisible by 4 (quaternion)
    L, N = 8, 2                       # (seq_len, batch)

    root = jax.random.PRNGKey(0)
    kp, kx = jax.random.split(root)
    params = init_params(kp, embed_dim)
    prepared = prepare_params(params, num_heads)         # one-time static weight transform
    query = jax.random.normal(kx, (L, N, embed_dim), jnp.float32)

    fwd = jax.jit(qmha_forward, static_argnums=(4, 5))

    # need_weights=True path (module default).
    out, attn = fwd(query, query, query, prepared, num_heads, True)
    out, attn = jax.block_until_ready((out, attn))

    # need_weights=False hot path (no (N,L,L) output materialized).
    out_fast, attn_none = fwd(query, query, query, prepared, num_heads, False)
    out_fast = jax.block_until_ready(out_fast)

    ref_out, ref_attn = reference_forward(query, params, num_heads)
    assert out.shape == (L, N, embed_dim) and attn.shape == (N, L, L)
    assert attn_none is None and out_fast.shape == (L, N, embed_dim)
    # Output tolerance accounts for the EUP approximate reciprocal used to
    # normalize the context; attention weights use exact normalization.
    assert jnp.allclose(out, ref_out, atol=5e-3, rtol=5e-3)
    assert jnp.allclose(out_fast, ref_out, atol=5e-3, rtol=5e-3)
    assert jnp.allclose(attn, ref_attn, atol=1e-4, rtol=1e-4)

    print("KERNEL_OK")
</pallas_src>

<mosaic_0001>
module attributes {stable_mosaic.version = 11 : i64} {
  func.func @_fused_qmha_kernel(%arg0: i32, %arg1: memref<1x8x32xf32, #tpu.memory_space<vmem>>, %arg2: memref<32x96xf32, #tpu.memory_space<vmem>>, %arg3: memref<1x96xf32, #tpu.memory_space<vmem>>, %arg4: memref<32x32xf32, #tpu.memory_space<vmem>>, %arg5: memref<1x32xf32, #tpu.memory_space<vmem>>, %arg6: memref<1x8x32xf32, #tpu.memory_space<vmem>>, %arg7: memref<1x8x8xf32, #tpu.memory_space<vmem>>) attributes {dimension_semantics = [#tpu.dimension_semantics<parallel>], iteration_bounds = array<i64: 2>, scalar_prefetch = 0 : i64, scratch_operands = 0 : i64, tpu.core_type = #tpu.core_type<tc>, window_params = [{transform_indices = @transform_0, window_bounds = array<i64: 1, 8, 32>}, {pipeline_mode = #tpu.pipeline_mode<synchronous>, transform_indices = @transform_1, window_bounds = array<i64: 32, 96>}, {pipeline_mode = #tpu.pipeline_mode<synchronous>, transform_indices = @transform_2, window_bounds = array<i64: 1, 96>}, {pipeline_mode = #tpu.pipeline_mode<synchronous>, transform_indices = @transform_3, window_bounds = array<i64: 32, 32>}, {pipeline_mode = #tpu.pipeline_mode<synchronous>, transform_indices = @transform_4, window_bounds = array<i64: 1, 32>}, {transform_indices = @transform_5, window_bounds = array<i64: 1, 8, 32>}, {transform_indices = @transform_6, window_bounds = array<i64: 1, 8, 8>}]} {
    %c0 = arith.constant 0 : index
    %c0_0 = arith.constant 0 : index
    %c0_1 = arith.constant 0 : index
    %0 = vector.load %arg1[%c0, %c0_0, %c0_1] : memref<1x8x32xf32, #tpu.memory_space<vmem>>, vector<1x8x32xf32>
    %1 = vector.shape_cast %0 : vector<1x8x32xf32> to vector<8x32xf32>
    %c0_2 = arith.constant 0 : index
    %c0_3 = arith.constant 0 : index
    %2 = vector.load %arg2[%c0_2, %c0_3] : memref<32x96xf32, #tpu.memory_space<vmem>>, vector<32x96xf32>
    %cst = arith.constant dense<0.000000e+00> : vector<8x96xf32>
    %3 = tpu.matmul %1, %2, %cst {dimension_numbers = #tpu.dot_dimension_numbers<[1], [0], [0], [1], [0, 0, 1, 1], [], []>} : vector<8x32xf32>, vector<32x96xf32>, vector<8x96xf32> -> vector<8x96xf32>
    %c0_4 = arith.constant 0 : index
    %c0_5 = arith.constant 0 : index
    %4 = vector.load %arg3[%c0_4, %c0_5] : memref<1x96xf32, #tpu.memory_space<vmem>>, vector<1x96xf32>
    %5 = vector.broadcast %4 : vector<1x96xf32> to vector<8x96xf32>
    %6 = arith.addf %3, %5 : vector<8x96xf32>
    %cst_6 = arith.constant 0.000000e+00 : f32
    %7 = vector.broadcast %cst_6 : f32 to vector<8x32xf32>
    %cst_7 = arith.constant 0.000000e+00 : f32
    %8 = vector.broadcast %cst_7 : f32 to vector<8x8xf32>
    %9 = vector.extract_strided_slice %6 {offsets = [0, 0], sizes = [8, 8], strides = [1, 1]} : vector<8x96xf32> to vector<8x8xf32>
    %10 = vector.extract_strided_slice %6 {offsets = [0, 32], sizes = [8, 8], strides = [1, 1]} : vector<8x96xf32> to vector<8x8xf32>
    %11 = vector.extract_strided_slice %6 {offsets = [0, 64], sizes = [8, 8], strides = [1, 1]} : vector<8x96xf32> to vector<8x8xf32>
    %cst_8 = arith.constant dense<0.000000e+00> : vector<8x8xf32>
    %12 = tpu.matmul %9, %10, %cst_8 {dimension_numbers = #tpu.dot_dimension_numbers<[1], [1], [0], [0], [0, 0, 1, 0], [], []>} : vector<8x8xf32>, vector<8x8xf32>, vector<8x8xf32> -> vector<8x8xf32>
    %cst_9 = arith.constant dense<0xFF800000> : vector<8xf32>
    %13 = vector.multi_reduction <maximumf>, %12, %cst_9 [1] : vector<8x8xf32> to vector<8xf32>
    %14 = vector.shape_cast %13 : vector<8xf32> to vector<8x1xf32>
    %15 = vector.broadcast %14 : vector<8x1xf32> to vector<8x8xf32>
    %16 = arith.subf %12, %15 : vector<8x8xf32>
    %17 = math.exp %16 : vector<8x8xf32>
    %cst_10 = arith.constant dense<0.000000e+00> : vector<8xf32>
    %18 = vector.multi_reduction <add>, %17, %cst_10 [1] : vector<8x8xf32> to vector<8xf32>
    %19 = vector.shape_cast %18 : vector<8xf32> to vector<8x1xf32>
    %cst_11 = arith.constant dense<0.000000e+00> : vector<8x8xf32>
    %20 = tpu.matmul %17, %11, %cst_11 {dimension_numbers = #tpu.dot_dimension_numbers<[1], [0], [0], [1], [0, 0, 1, 1], [], []>} : vector<8x8xf32>, vector<8x8xf32>, vector<8x8xf32> -> vector<8x8xf32>
    %21 = tpu.reciprocal %19 {approx = true} : vector<8x1xf32> -> vector<8x1xf32>
    %22 = vector.broadcast %21 : vector<8x1xf32> to vector<8x8xf32>
    %23 = arith.mulf %20, %22 : vector<8x8xf32>
    %c0_12 = arith.constant 0 : index
    %c0_13 = arith.constant 0 : index
    %24 = vector.load %arg4[%c0_12, %c0_13] : memref<32x32xf32, #tpu.memory_space<vmem>>, vector<8x32xf32>
    %cst_14 = arith.constant dense<0.000000e+00> : vector<8x32xf32>
    %25 = tpu.matmul %23, %24, %cst_14 {dimension_numbers = #tpu.dot_dimension_numbers<[1], [0], [0], [1], [0, 0, 1, 1], [], []>} : vector<8x8xf32>, vector<8x32xf32>, vector<8x32xf32> -> vector<8x32xf32>
    %26 = arith.addf %7, %25 : vector<8x32xf32>
    %27 = vector.broadcast %19 : vector<8x1xf32> to vector<8x8xf32>
    %28 = arith.divf %17, %27 : vector<8x8xf32>
    %29 = arith.addf %8, %28 : vector<8x8xf32>
    %30 = vector.extract_strided_slice %6 {offsets = [0, 8], sizes = [8, 8], strides = [1, 1]} : vector<8x96xf32> to vector<8x8xf32>
    %31 = vector.extract_strided_slice %6 {offsets = [0, 40], sizes = [8, 8], strides = [1, 1]} : vector<8x96xf32> to vector<8x8xf32>
    %32 = vector.extract_strided_slice %6 {offsets = [0, 72], sizes = [8, 8], strides = [1, 1]} : vector<8x96xf32> to vector<8x8xf32>
    %cst_15 = arith.constant dense<0.000000e+00> : vector<8x8xf32>
    %33 = tpu.matmul %30, %31, %cst_15 {dimension_numbers = #tpu.dot_dimension_numbers<[1], [1], [0], [0], [0, 0, 1, 0], [], []>} : vector<8x8xf32>, vector<8x8xf32>, vector<8x8xf32> -> vector<8x8xf32>
    %cst_16 = arith.constant dense<0xFF800000> : vector<8xf32>
    %34 = vector.multi_reduction <maximumf>, %33, %cst_16 [1] : vector<8x8xf32> to vector<8xf32>
    %35 = vector.shape_cast %34 : vector<8xf32> to vector<8x1xf32>
    %36 = vector.broadcast %35 : vector<8x1xf32> to vector<8x8xf32>
    %37 = arith.subf %33, %36 : vector<8x8xf32>
    %38 = math.exp %37 : vector<8x8xf32>
    %cst_17 = arith.constant dense<0.000000e+00> : vector<8xf32>
    %39 = vector.multi_reduction <add>, %38, %cst_17 [1] : vector<8x8xf32> to vector<8xf32>
    %40 = vector.shape_cast %39 : vector<8xf32> to vector<8x1xf32>
    %cst_18 = arith.constant dense<0.000000e+00> : vector<8x8xf32>
    %41 = tpu.matmul %38, %32, %cst_18 {dimension_numbers = #tpu.dot_dimension_numbers<[1], [0], [0], [1], [0, 0, 1, 1], [], []>} : vector<8x8xf32>, vector<8x8xf32>, vector<8x8xf32> -> vector<8x8xf32>
    %42 = tpu.reciprocal %40 {approx = true} : vector<8x1xf32> -> vector<8x1xf32>
    %43 = vector.broadcast %42 : vector<8x1xf32> to vector<8x8xf32>
    %44 = arith.mulf %41, %43 : vector<8x8xf32>
    %c8 = arith.constant 8 : index
    %c0_19 = arith.constant 0 : index
    %45 = vector.load %arg4[%c8, %c0_19] : memref<32x32xf32, #tpu.memory_space<vmem>>, vector<8x32xf32>
    %cst_20 = arith.constant dense<0.000000e+00> : vector<8x32xf32>
    %46 = tpu.matmul %44, %45, %cst_20 {dimension_numbers = #tpu.dot_dimension_numbers<[1], [0], [0], [1], [0, 0, 1, 1], [], []>} : vector<8x8xf32>, vector<8x32xf32>, vector<8x32xf32> -> vector<8x32xf32>
    %47 = arith.addf %26, %46 : vector<8x32xf32>
    %48 = vector.broadcast %40 : vector<8x1xf32> to vector<8x8xf32>
    %49 = arith.divf %38, %48 : vector<8x8xf32>
    %50 = arith.addf %29, %49 : vector<8x8xf32>
    %51 = vector.extract_strided_slice %6 {offsets = [0, 16], sizes = [8, 8], strides = [1, 1]} : vector<8x96xf32> to vector<8x8xf32>
    %52 = vector.extract_strided_slice %6 {offsets = [0, 48], sizes = [8, 8], strides = [1, 1]} : vector<8x96xf32> to vector<8x8xf32>
    %53 = vector.extract_strided_slice %6 {offsets = [0, 80], sizes = [8, 8], strides = [1, 1]} : vector<8x96xf32> to vector<8x8xf32>
    %cst_21 = arith.constant dense<0.000000e+00> : vector<8x8xf32>
    %54 = tpu.matmul %51, %52, %cst_21 {dimension_numbers = #tpu.dot_dimension_numbers<[1], [1], [0], [0], [0, 0, 1, 0], [], []>} : vector<8x8xf32>, vector<8x8xf32>, vector<8x8xf32> -> vector<8x8xf32>
    %cst_22 = arith.constant dense<0xFF800000> : vector<8xf32>
    %55 = vector.multi_reduction <maximumf>, %54, %cst_22 [1] : vector<8x8xf32> to vector<8xf32>
    %56 = vector.shape_cast %55 : vector<8xf32> to vector<8x1xf32>
    %57 = vector.broadcast %56 : vector<8x1xf32> to vector<8x8xf32>
    %58 = arith.subf %54, %57 : vector<8x8xf32>
    %59 = math.exp %58 : vector<8x8xf32>
    %cst_23 = arith.constant dense<0.000000e+00> : vector<8xf32>
    %60 = vector.multi_reduction <add>, %59, %cst_23 [1] : vector<8x8xf32> to vector<8xf32>
    %61 = vector.shape_cast %60 : vector<8xf32> to vector<8x1xf32>
    %cst_24 = arith.constant dense<0.000000e+00> : vector<8x8xf32>
    %62 = tpu.matmul %59, %53, %cst_24 {dimension_numbers = #tpu.dot_dimension_numbers<[1], [0], [0], [1], [0, 0, 1, 1], [], []>} : vector<8x8xf32>, vector<8x8xf32>, vector<8x8xf32> -> vector<8x8xf32>
    %63 = tpu.reciprocal %61 {approx = true} : vector<8x1xf32> -> vector<8x1xf32>
    %64 = vector.broadcast %63 : vector<8x1xf32> to vector<8x8xf32>
    %65 = arith.mulf %62, %64 : vector<8x8xf32>
    %c16 = arith.constant 16 : index
    %c0_25 = arith.constant 0 : index
    %66 = vector.load %arg4[%c16, %c0_25] : memref<32x32xf32, #tpu.memory_space<vmem>>, vector<8x32xf32>
    %cst_26 = arith.constant dense<0.000000e+00> : vector<8x32xf32>
    %67 = tpu.matmul %65, %66, %cst_26 {dimension_numbers = #tpu.dot_dimension_numbers<[1], [0], [0], [1], [0, 0, 1, 1], [], []>} : vector<8x8xf32>, vector<8x32xf32>, vector<8x32xf32> -> vector<8x32xf32>
    %68 = arith.addf %47, %67 : vector<8x32xf32>
    %69 = vector.broadcast %61 : vector<8x1xf32> to vector<8x8xf32>
    %70 = arith.divf %59, %69 : vector<8x8xf32>
    %71 = arith.addf %50, %70 : vector<8x8xf32>
    %72 = vector.extract_strided_slice %6 {offsets = [0, 24], sizes = [8, 8], strides = [1, 1]} : vector<8x96xf32> to vector<8x8xf32>
    %73 = vector.extract_strided_slice %6 {offsets = [0, 56], sizes = [8, 8], strides = [1, 1]} : vector<8x96xf32> to vector<8x8xf32>
    %74 = vector.extract_strided_slice %6 {offsets = [0, 88], sizes = [8, 8], strides = [1, 1]} : vector<8x96xf32> to vector<8x8xf32>
    %cst_27 = arith.constant dense<0.000000e+00> : vector<8x8xf32>
    %75 = tpu.matmul %72, %73, %cst_27 {dimension_numbers = #tpu.dot_dimension_numbers<[1], [1], [0], [0], [0, 0, 1, 0], [], []>} : vector<8x8xf32>, vector<8x8xf32>, vector<8x8xf32> -> vector<8x8xf32>
    %cst_28 = arith.constant dense<0xFF800000> : vector<8xf32>
    %76 = vector.multi_reduction <maximumf>, %75, %cst_28 [1] : vector<8x8xf32> to vector<8xf32>
    %77 = vector.shape_cast %76 : vector<8xf32> to vector<8x1xf32>
    %78 = vector.broadcast %77 : vector<8x1xf32> to vector<8x8xf32>
    %79 = arith.subf %75, %78 : vector<8x8xf32>
    %80 = math.exp %79 : vector<8x8xf32>
    %cst_29 = arith.constant dense<0.000000e+00> : vector<8xf32>
    %81 = vector.multi_reduction <add>, %80, %cst_29 [1] : vector<8x8xf32> to vector<8xf32>
    %82 = vector.shape_cast %81 : vector<8xf32> to vector<8x1xf32>
    %cst_30 = arith.constant dense<0.000000e+00> : vector<8x8xf32>
    %83 = tpu.matmul %80, %74, %cst_30 {dimension_numbers = #tpu.dot_dimension_numbers<[1], [0], [0], [1], [0, 0, 1, 1], [], []>} : vector<8x8xf32>, vector<8x8xf32>, vector<8x8xf32> -> vector<8x8xf32>
    %84 = tpu.reciprocal %82 {approx = true} : vector<8x1xf32> -> vector<8x1xf32>
    %85 = vector.broadcast %84 : vector<8x1xf32> to vector<8x8xf32>
    %86 = arith.mulf %83, %85 : vector<8x8xf32>
    %c24 = arith.constant 24 : index
    %c0_31 = arith.constant 0 : index
    %87 = vector.load %arg4[%c24, %c0_31] : memref<32x32xf32, #tpu.memory_space<vmem>>, vector<8x32xf32>
    %cst_32 = arith.constant dense<0.000000e+00> : vector<8x32xf32>
    %88 = tpu.matmul %86, %87, %cst_32 {dimension_numbers = #tpu.dot_dimension_numbers<[1], [0], [0], [1], [0, 0, 1, 1], [], []>} : vector<8x8xf32>, vector<8x32xf32>, vector<8x32xf32> -> vector<8x32xf32>
    %89 = arith.addf %68, %88 : vector<8x32xf32>
    %90 = vector.broadcast %82 : vector<8x1xf32> to vector<8x8xf32>
    %91 = arith.divf %80, %90 : vector<8x8xf32>
    %92 = arith.addf %71, %91 : vector<8x8xf32>
    %c0_33 = arith.constant 0 : index
    %c0_34 = arith.constant 0 : index
    %93 = vector.load %arg5[%c0_33, %c0_34] : memref<1x32xf32, #tpu.memory_space<vmem>>, vector<1x32xf32>
    %94 = vector.broadcast %93 : vector<1x32xf32> to vector<8x32xf32>
    %95 = arith.addf %89, %94 : vector<8x32xf32>
    %c0_35 = arith.constant 0 : index
    %c0_36 = arith.constant 0 : index
    %c0_37 = arith.constant 0 : index
    %96 = vector.load %arg6[%c0_35, %c0_36, %c0_37] : memref<1x8x32xf32, #tpu.memory_space<vmem>>, vector<1x8x32xf32>
    %97 = vector.shape_cast %96 : vector<1x8x32xf32> to vector<8x32xf32>
    %98 = vector.shape_cast %95 : vector<8x32xf32> to vector<1x8x32xf32>
    tpu.vector_store %arg6[%c0_35, %c0_36, %c0_37], %98 {strides = array<i32>} : memref<1x8x32xf32, #tpu.memory_space<vmem>>, vector<1x8x32xf32>,
    %cst_38 = arith.constant 2.500000e-01 : f32
    %99 = vector.broadcast %cst_38 : f32 to vector<8x8xf32>
    %100 = arith.mulf %92, %99 : vector<8x8xf32>
    %c0_39 = arith.constant 0 : index
    %c0_40 = arith.constant 0 : index
    %c0_41 = arith.constant 0 : index
    %101 = vector.load %arg7[%c0_39, %c0_40, %c0_41] : memref<1x8x8xf32, #tpu.memory_space<vmem>>, vector<1x8x8xf32>
    %102 = vector.shape_cast %101 : vector<1x8x8xf32> to vector<8x8xf32>
    %103 = vector.shape_cast %100 : vector<8x8xf32> to vector<1x8x8xf32>
    tpu.vector_store %arg7[%c0_39, %c0_40, %c0_41], %103 {strides = array<i32>} : memref<1x8x8xf32, #tpu.memory_space<vmem>>, vector<1x8x8xf32>,
    return
  }
  func.func @transform_0(%arg0: i32) -> (i32, i32, i32) {
    %c0_i32 = arith.constant 0 : i32
    %c0_i32_0 = arith.constant 0 : i32
    %c0_i32_1 = arith.constant 0 : i32
    return %arg0, %c0_i32, %c0_i32_0 : i32, i32, i32
  }
  func.func @transform_1(%arg0: i32) -> (i32, i32) {
    %c0_i32 = arith.constant 0 : i32
    %c0_i32_0 = arith.constant 0 : i32
    %c0_i32_1 = arith.constant 0 : i32
    return %c0_i32, %c0_i32_0 : i32, i32
  }
  func.func @transform_2(%arg0: i32) -> (i32, i32) {
    %c0_i32 = arith.constant 0 : i32
    %c0_i32_0 = arith.constant 0 : i32
    %c0_i32_1 = arith.constant 0 : i32
    return %c0_i32, %c0_i32_0 : i32, i32
  }
  func.func @transform_3(%arg0: i32) -> (i32, i32) {
    %c0_i32 = arith.constant 0 : i32
    %c0_i32_0 = arith.constant 0 : i32
    %c0_i32_1 = arith.constant 0 : i32
    return %c0_i32, %c0_i32_0 : i32, i32
  }
  func.func @transform_4(%arg0: i32) -> (i32, i32) {
    %c0_i32 = arith.constant 0 : i32
    %c0_i32_0 = arith.constant 0 : i32
    %c0_i32_1 = arith.constant 0 : i32
    return %c0_i32, %c0_i32_0 : i32, i32
  }
  func.func @transform_5(%arg0: i32) -> (i32, i32, i32) {
    %c0_i32 = arith.constant 0 : i32
    %c0_i32_0 = arith.constant 0 : i32
    %c0_i32_1 = arith.constant 0 : i32
    return %arg0, %c0_i32, %c0_i32_0 : i32, i32, i32
  }
  func.func @transform_6(%arg0: i32) -> (i32, i32, i32) {
    %c0_i32 = arith.constant 0 : i32
    %c0_i32_0 = arith.constant 0 : i32
    %c0_i32_1 = arith.constant 0 : i32
    return %arg0, %c0_i32, %c0_i32_0 : i32, i32, i32
  }
}

</mosaic_0001>

<llo_original>
// kernel: qmha_forward.1
$region0: #{qmha_forward.1}
  #allocation0 [shape = 'u32[]', space=smem, size = 0x4, offset = 0x4, fixed_abs, tag = 'smem constant byte address 0x4 - core index']
  #allocation1 [shape = 'u32[72,128]{1,0:T(1,128)}', space=vmem, size = 0x9000, scoped, tag = 'internal scratch']
  %s0 = inlined_call_operand.vmem [shape: f32[2,8,32], index: 0, kind: input, shape index: {}]
  %s1 = inlined_call_operand.vmem [shape: f32[32,96], index: 1, kind: input, shape index: {}]
  %s2 = inlined_call_operand.vmem [shape: f32[1,96], index: 2, kind: input, shape index: {}]
  %s3 = inlined_call_operand.hbm [shape: f32[32,32], index: 3, kind: input, shape index: {}]
  %s4 = inlined_call_operand.vmem [shape: f32[1,32], index: 4, kind: input, shape index: {}]
  %s5 = inlined_call_operand.vmem [shape: f32[2,8,32], index: 5, kind: output, shape index: {0}]
  %s6 = inlined_call_operand.hbm [shape: f32[2,8,8], index: 6, kind: output, shape index: {1}]
  %7 = xla_tuple %s5, %s6
  %s8 = sld [smem:[#allocation0]]
  $region65: #{qmha_forward.1} parent=0
    _
  %s10 = ssub.s32 1, %s8
  %s11 = scalar_select 0, %s10, %s8
  $region1: #{qmha_forward.1} parent=0
    #allocation2 [shape = 'u8[16384]{0}', space=vmem, size = 0x4000, scoped, tag = 'input window, operand 3, single buffered']
    #allocation3 [shape = 's32[2]{0}', space=sflag, size = 0x8, scoped, tag = 'scoped memory for qmha_forward.1']
    #allocation4 [shape = 's32[2]{0}', space=sflag, size = 0x8, scoped, tag = 'scoped memory for qmha_forward.1']
    #allocation5 [shape = 'u8[8192]{0}', space=vmem, size = 0x2000, scoped, tag = 'output window, operand 1']
    %12 = vsyncpa [#allocation3], 0
    %13 = vsyncpa [#allocation4], 0
    %s14 = scalar_lea.sflag [#allocation4], 1
    %15 = vsyncpa %s14, 0
    loop: start=0, step=1, limit=4
    $region2: #{qmha_forward.1} parent=1 // loop_pre_header
      _
    $region3: #{qmha_forward.1} parent=1 // loop_header
      %s17 = sphi 0, %s21
      %p18 = scmp.ge.s32.totalorder %s17, 4
      %s27 = sphi 0, %s29
      %s30 = sphi 0, %s27
      %s31 = sphi 0, %s30
      %s47 = sphi 0, %s31
      %s51 = sphi 0, %s51
      %s53 = sphi 0, %s51
      %s54 = sphi 0, %s53
      %s68 = sphi 0, %s54
      %s72 = sphi 0, %s72
      %s74 = sphi 0, %s72
      %s75 = sphi 0, %s74
      %s89 = sphi 0, %s75
      %s93 = sphi 0, %s93
      %s95 = sphi 0, %s93
      %s96 = sphi 0, %s95
      %s110 = sphi 0, %s96
      %s114 = sphi 0, %s114
      %s116 = sphi 0, %s114
      %s117 = sphi 0, %s116
      %s131 = sphi 0, %s117
      %s137 = sphi 0, %s139
      %s140 = sphi 0, %s137
      %s141 = sphi 0, %s140
      %s157 = sphi 0, %s141
      %s163 = sphi 0, %s165
      %s166 = sphi 0, %s163
      %s167 = sphi 0, %s166
      %s183 = sphi 0, %s167
    $region4: #{qmha_forward.1} parent=1 // loop_header_branch
      %20 = sbr.rel (%p18) target = $region8
    $region5: #{qmha_forward.1} parent=1 // loop_body
      %s22 = ssub.s32 %s17, 1
      %s23 = ssub.s32 %s17, 2
      %s24 = sadd.s32 %s17, 1
      %s25 = ssub.s32 %s17, %s24
      %p26 = scmp.eq.s32.totalorder %s25, 0
      %s28 = sadd.s32 %s27, 1
      %s29 = scalar_select %p26, %s27, %s28
      %p32 = pneg %p26
      %p33 = scmp.eq.s32.totalorder %s17, 1
      %p34 = por %p32, %p33
      %p35 = scmp.ne.s32.totalorder %s27, %s30
      %p36 = scmp.eq.s32.totalorder %s17, 0
      %p37 = por %p35, %p36
      %p38 = scmp.ne.s32.totalorder %s27, %s30
      %p39 = scmp.eq.s32.totalorder %s22, 1
      %p40 = por %p38, %p39
      %p41 = scmp.ne.s32.totalorder %s30, %s31
      %p42 = scmp.eq.s32.totalorder %s22, 0
      %p43 = por %p41, %p42
      %p44 = scmp.ne.s32.totalorder %s30, %s31
      %p45 = scmp.eq.s32.totalorder %s23, 1
      %p46 = por %p44, %p45
      %p48 = scmp.ne.s32.totalorder %s31, %s47
      %p49 = scmp.eq.s32.totalorder %s23, 0
      %p50 = por %p48, %p49
      %s52 = sadd.s32 %s51, 1
      %p55 = scmp.eq.s32.totalorder %s17, 1
      %p56 = scmp.ne.s32.totalorder %s51, %s53
      %p57 = scmp.eq.s32.totalorder %s17, 0
      %p58 = por %p56, %p57
      %p59 = scmp.ne.s32.totalorder %s51, %s53
      %p60 = scmp.eq.s32.totalorder %s22, 1
      %p61 = por %p59, %p60
      %p62 = scmp.ne.s32.totalorder %s53, %s54
      %p63 = scmp.eq.s32.totalorder %s22, 0
      %p64 = por %p62, %p63
      %p65 = scmp.ne.s32.totalorder %s53, %s54
      %p66 = scmp.eq.s32.totalorder %s23, 1
      %p67 = por %p65, %p66
      %p69 = scmp.ne.s32.totalorder %s54, %s68
      %p70 = scmp.eq.s32.totalorder %s23, 0
      %p71 = por %p69, %p70
      %s73 = sadd.s32 %s72, 1
      %p76 = scmp.eq.s32.totalorder %s17, 1
      %p77 = scmp.ne.s32.totalorder %s72, %s74
      %p78 = scmp.eq.s32.totalorder %s17, 0
      %p79 = por %p77, %p78
      %p80 = scmp.ne.s32.totalorder %s72, %s74
      %p81 = scmp.eq.s32.totalorder %s22, 1
      %p82 = por %p80, %p81
      %p83 = scmp.ne.s32.totalorder %s74, %s75
      %p84 = scmp.eq.s32.totalorder %s22, 0
      %p85 = por %p83, %p84
      %p86 = scmp.ne.s32.totalorder %s74, %s75
      %p87 = scmp.eq.s32.totalorder %s23, 1
      %p88 = por %p86, %p87
      %p90 = scmp.ne.s32.totalorder %s75, %s89
      %p91 = scmp.eq.s32.totalorder %s23, 0
      %p92 = por %p90, %p91
      %s94 = sadd.s32 %s93, 1
      %p97 = scmp.eq.s32.totalorder %s17, 1
      %p98 = scmp.ne.s32.totalorder %s93, %s95
      %p99 = scmp.eq.s32.totalorder %s17, 0
      %p100 = por %p98, %p99
      %p101 = scmp.ne.s32.totalorder %s93, %s95
      %p102 = scmp.eq.s32.totalorder %s22, 1
      %p103 = por %p101, %p102
      %p104 = scmp.ne.s32.totalorder %s95, %s96
      %p105 = scmp.eq.s32.totalorder %s22, 0
      %p106 = por %p104, %p105
      %p107 = scmp.ne.s32.totalorder %s95, %s96
      %p108 = scmp.eq.s32.totalorder %s23, 1
      %p109 = por %p107, %p108
      %p111 = scmp.ne.s32.totalorder %s96, %s110
      %p112 = scmp.eq.s32.totalorder %s23, 0
      %p113 = por %p111, %p112
      %s115 = sadd.s32 %s114, 1
      %p118 = scmp.eq.s32.totalorder %s17, 1
      %p119 = scmp.ne.s32.totalorder %s114, %s116
      %p120 = scmp.eq.s32.totalorder %s17, 0
      %p121 = por %p119, %p120
      %p122 = scmp.ne.s32.totalorder %s114, %s116
      %p123 = scmp.eq.s32.totalorder %s22, 1
      %p124 = por %p122, %p123
      %p125 = scmp.ne.s32.totalorder %s116, %s117
      %p126 = scmp.eq.s32.totalorder %s22, 0
      %p127 = por %p125, %p126
      %p128 = scmp.ne.s32.totalorder %s116, %s117
      %p129 = scmp.eq.s32.totalorder %s23, 1
      %p130 = por %p128, %p129
      %p132 = scmp.ne.s32.totalorder %s117, %s131
      %p133 = scmp.eq.s32.totalorder %s23, 0
      %p134 = por %p132, %p133
      %s135 = ssub.s32 %s17, %s24
      %p136 = scmp.eq.s32.totalorder %s135, 0
      %s138 = sadd.s32 %s137, 1
      %s139 = scalar_select %p136, %s137, %s138
      %p142 = pneg %p136
      %p143 = scmp.eq.s32.totalorder %s17, 1
      %p144 = por %p142, %p143
      %p145 = scmp.ne.s32.totalorder %s137, %s140
      %p146 = scmp.eq.s32.totalorder %s17, 0
      %p147 = por %p145, %p146
      %p148 = scmp.ne.s32.totalorder %s137, %s140
      %p149 = scmp.eq.s32.totalorder %s22, 1
      %p150 = por %p148, %p149
      %p151 = scmp.ne.s32.totalorder %s140, %s141
      %p152 = scmp.eq.s32.totalorder %s22, 0
      %p153 = por %p151, %p152
      %p154 = scmp.ne.s32.totalorder %s140, %s141
      %p155 = scmp.eq.s32.totalorder %s23, 1
      %p156 = por %p154, %p155
      %p158 = scmp.ne.s32.totalorder %s141, %s157
      %p159 = scmp.eq.s32.totalorder %s23, 0
      %p160 = por %p158, %p159
      %s161 = ssub.s32 %s17, %s24
      %p162 = scmp.eq.s32.totalorder %s161, 0
      %s164 = sadd.s32 %s163, 1
      %s165 = scalar_select %p162, %s163, %s164
      %p168 = pneg %p162
      %p169 = scmp.eq.s32.totalorder %s17, 1
      %p170 = por %p168, %p169
      %p171 = scmp.ne.s32.totalorder %s163, %s166
      %p172 = scmp.eq.s32.totalorder %s17, 0
      %p173 = por %p171, %p172
      %p174 = scmp.ne.s32.totalorder %s163, %s166
      %p175 = scmp.eq.s32.totalorder %s22, 1
      %p176 = por %p174, %p175
      %p177 = scmp.ne.s32.totalorder %s166, %s167
      %p178 = scmp.eq.s32.totalorder %s22, 0
      %p179 = por %p177, %p178
      %p180 = scmp.ne.s32.totalorder %s166, %s167
      %p181 = scmp.eq.s32.totalorder %s23, 1
      %p182 = por %p180, %p181
      %p184 = scmp.ne.s32.totalorder %s167, %s183
      %p185 = scmp.eq.s32.totalorder %s23, 0
      %p186 = por %p184, %p185
      %p187 = scmp.le.s32.totalorder 1, %s17
      %p188 = scmp.lt.s32.totalorder %s17, 3
      %p189 = pnand %p187, %p188
      %p190 = pneg %p189
      // Predicated region
      $region9: #{qmha_forward.1} parent=5 // pred_check
        _
      $region10: #{qmha_forward.1} parent=5 // pred_check_branch
        %192 = sbr.rel (%p189) target = $region12
      $region11: #{qmha_forward.1} parent=5 // pred_region
        %s193 = ssub.s32 %s17, 1
        // Predicated region
        $region13: #{qmha_forward.1} parent=11 // pred_check
          %p194 = pneg %p64
        $region14: #{qmha_forward.1} parent=11 // pred_check_branch
          %196 = sbr.rel (%p194) target = $region16
        $region15: #{qmha_forward.1} parent=11 // pred_region
          _
        $region16: #{qmha_forward.1} parent=11 // pred_fallthru
          _
        // Predicated region
        $region17: #{qmha_forward.1} parent=11 // pred_check
          %p197 = pneg %p85
        $region18: #{qmha_forward.1} parent=11 // pred_check_branch
          %199 = sbr.rel (%p197) target = $region20
        $region19: #{qmha_forward.1} parent=11 // pred_region
          _
        $region20: #{qmha_forward.1} parent=11 // pred_fallthru
          _
        // Predicated region
        $region21: #{qmha_forward.1} parent=11 // pred_check
          %p200 = pneg %p106
        $region22: #{qmha_forward.1} parent=11 // pred_check_branch
          %202 = sbr.rel (%p200) target = $region24
        $region23: #{qmha_forward.1} parent=11 // pred_region
          %204 = vsyncadd [#allocation3], 0
          %s205 = sshll.u32 %s3, 4
          %s206 = int_to_ptr.hbm [resolvable:$true] %s205
          %s207 = sshll.u32 [#allocation2], 4
          %s208 = int_to_ptr.vmem [resolvable:$true] %s207
          %213 = dma.hbm_to_vmem [thread:$0]  %s206, 512, %s208, [#allocation3], 128, 128, 8
        $region24: #{qmha_forward.1} parent=11 // pred_fallthru
          _
        // Predicated region
        $region25: #{qmha_forward.1} parent=11 // pred_check
          %p214 = pneg %p127
        $region26: #{qmha_forward.1} parent=11 // pred_check_branch
          %216 = sbr.rel (%p214) target = $region28
        $region27: #{qmha_forward.1} parent=11 // pred_region
          _
        $region28: #{qmha_forward.1} parent=11 // pred_fallthru
          _
      $region12: #{qmha_forward.1} parent=5 // pred_fallthru
        _
      %p217 = scmp.lt.s32.totalorder %s17, 2
      // Predicated region
      $region29: #{qmha_forward.1} parent=5 // pred_check
        %p218 = pneg %p217
      $region30: #{qmha_forward.1} parent=5 // pred_check_branch
        %220 = sbr.rel (%p218) target = $region32
      $region31: #{qmha_forward.1} parent=5 // pred_region
        // Predicated region
        $region33: #{qmha_forward.1} parent=31 // pred_check
          %p221 = pneg %p37
        $region34: #{qmha_forward.1} parent=31 // pred_check_branch
          %223 = sbr.rel (%p221) target = $region36
        $region35: #{qmha_forward.1} parent=31 // pred_region
          %p224 = scmp.lt.s32.totalorder %s17, 1
          %s225 = scalar_select %p224, %s17, 1
          %s226 = smul.addr %s225, 8
          %s227 = scalar_lea.vmem %s0, %s226
        $region36: #{qmha_forward.1} parent=31 // pred_fallthru
          _
      $region32: #{qmha_forward.1} parent=5 // pred_fallthru
        _
      %p228 = scmp.le.s32.totalorder 1, %s17
      %p229 = scmp.lt.s32.totalorder %s17, 3
      %p230 = pnand %p228, %p229
      %p231 = pneg %p230
      // Predicated region
      $region37: #{qmha_forward.1} parent=5 // pred_check
        _
      $region38: #{qmha_forward.1} parent=5 // pred_check_branch
        %233 = sbr.rel (%p230) target = $region40
      $region39: #{qmha_forward.1} parent=5 // pred_region
        %s234 = ssub.s32 %s17, 1
        // Predicated region
        $region41: #{qmha_forward.1} parent=39 // pred_check
          %p235 = pneg %p106
        $region42: #{qmha_forward.1} parent=39 // pred_check_branch
          %237 = sbr.rel (%p235) target = $region44
        $region43: #{qmha_forward.1} parent=39 // pred_region
          %239 = dma.done [#allocation3], 512
        $region44: #{qmha_forward.1} parent=39 // pred_fallthru
          _
        %p240 = scmp.lt.s32.totalorder %s22, 1
        %s241 = scalar_select %p240, %s22, 1
        %s242 = smul.addr %s241, 8
        %s243 = scalar_lea.vmem %s0, %s242
        %p244 = pneg %p43
        %p245 = pneg %p40
        %p246 = pneg %p64
        %p247 = pneg %p61
        %p248 = pneg %p85
        %p249 = pneg %p82
        %p250 = pneg %p106
        %p251 = pneg %p103
        %p252 = pneg %p127
        %p253 = pneg %p124
        %p254 = pneg %p153
        %p255 = pneg %p150
        %p256 = scmp.lt.s32.totalorder %s22, 1
        %s257 = scalar_select %p256, %s22, 1
        %s258 = smul.addr %s257, 8
        %s259 = scalar_lea.vmem %s5, %s258
        %p260 = pneg %p179
        %p261 = pneg %p176
        %s262 = sand.u32 %s166, 1
        %s263 = scalar_lea.sflag [#allocation4], %s262
        %s264 = sand.u32 %s166, 1
        %s265 = smul.addr %s264, 8
        %s266 = scalar_lea.vmem [#allocation5], %s265
        %p267 = scmp.lt.s32.totalorder %s22, 1
        %s268 = scalar_select %p267, %s22, 1
        %s269 = smul.addr %s268, 8
        %s270 = scalar_lea.vmem %s0, %s269
        %p271 = scmp.lt.s32.totalorder %s22, 1
        %s272 = scalar_select %p271, %s22, 1
        %s273 = smul.addr %s272, 8
        %s274 = scalar_lea.vmem %s5, %s273
        %v275 = vld [vmem:[%s270] sm:$0xff]
        %v276 = vld [vmem:[%s1] sm:$0xff]
        %v277 = vld [vmem:[%s1 + $0x8] sm:$0xff]
        %v278 = vld [vmem:[%s1 + $0x10] sm:$0xff]
        %v279 = vld [vmem:[%s1 + $0x18] sm:$0xff]
        %v280 = vld [vmem:[%s2] sm:$0x1]
        %v282 = vperm.slane %v280, 0
        %vm284 = vcmask 261120
        %v286 = vsel %vm284, %v275, 0
        %288 = vmatpush.msra.mxu0 0.0
        %289 = vmatpush.msra.mxu0 0.0
        %290 = vmatpush.msra.mxu0 0.0
        %291 = vmatpush.msra.mxu0 0.0
        %292 = vmatpush.msra.mxu0 0.0
        %293 = vmatpush.msra.mxu0 0.0
        %294 = vmatpush.msra.mxu0 0.0
        %295 = vmatpush.msra.mxu0 0.0
        %296 = vmatpush.msra.mxu0 0.0
        %297 = vmatpush.msra.mxu0 0.0
        %298 = vmatpush.msra.mxu0 0.0
        %299 = vmatpush.msra.mxu0 0.0
        %300 = vmatpush.msra.mxu0 %v279
        %301 = vmatpush.msra.mxu0 %v278
        %302 = vmatpush.msra.mxu0 %v277
        %303 = vmatpush.msra.mxu0 %v276
        %304 = vmatmul.f32.gmra.mxu0 %v286
        %v305 = vpop.f32.mrf.mxu0
        %v306 = vadd.f32 %v282, %v305
        %307 = vdwg.mxu0
        %309 = vrot.lane.b32.xlu0 %v306, 96
        %v310 = vpop.permute.xlu0 %309
        %vm311 = vcmask 64512
        %v312 = vsel %vm311, %v306, 0
        %v314 = vsel %vm311, %v310, 0
        %316 = vmatpush.xpose.msra.mxu0 0.0
        %317 = vmatpush.xpose.msra.mxu0 0.0
        %318 = vmatpush.xpose.msra.mxu0 0.0
        %319 = vmatpush.xpose.msra.mxu0 0.0
        %320 = vmatpush.xpose.msra.mxu0 0.0
        %321 = vmatpush.xpose.msra.mxu0 0.0
        %322 = vmatpush.xpose.msra.mxu0 0.0
        %323 = vmatpush.xpose.msra.mxu0 0.0
        %324 = vmatpush.xpose.msra.mxu0 0.0
        %325 = vmatpush.xpose.msra.mxu0 0.0
        %326 = vmatpush.xpose.msra.mxu0 0.0
        %327 = vmatpush.xpose.msra.mxu0 0.0
        %328 = vmatpush.xpose.msra.mxu0 0.0
        %329 = vmatpush.xpose.msra.mxu0 0.0
        %330 = vmatpush.xpose.msra.mxu0 0.0
        %331 = vmatpush.xpose.msra.mxu0 %v314
        %332 = vmatmul.f32.gmra.mxu0 %v312
        %v333 = vpop.f32.mrf.mxu0
        %v334 = vadd.f32 0.0, %v333
        %335 = vdwg.mxu0
        %v336 = vsel %vm311, %v334, -inf
        %337 = vmax.xlane.f32.xlu0 %v336
        %v338 = vpop.xlane.xlu0 %337
        %v339 = vsub.f32 %v334, %v338
        %v340 = vmul.f32 %v339, 1.442695
        %v341 = vpow.pop %v340
        %v342 = vsel %vm311, %v341, 0.0
        %343 = vadd.xlane.f32.xlu0 %v342
        %v344 = vpop.xlane.xlu0 %343
        %345 = vrot.lane.b32.xlu0 %v306, 64
        %v346 = vpop.permute.xlu0 %345
        %v349 = vsel %vm311, %v341, 0
        %351 = vmatpush.msra.mxu0 0.0
        %352 = vmatpush.msra.mxu0 0.0
        %353 = vmatpush.msra.mxu0 0.0
        %354 = vmatpush.msra.mxu0 0.0
        %355 = vmatpush.msra.mxu0 0.0
        %356 = vmatpush.msra.mxu0 0.0
        %357 = vmatpush.msra.mxu0 0.0
        %358 = vmatpush.msra.mxu0 0.0
        %359 = vmatpush.msra.mxu0 0.0
        %360 = vmatpush.msra.mxu0 0.0
        %361 = vmatpush.msra.mxu0 0.0
        %362 = vmatpush.msra.mxu0 0.0
        %363 = vmatpush.msra.mxu0 0.0
        %364 = vmatpush.msra.mxu0 0.0
        %365 = vmatpush.msra.mxu0 0.0
        %366 = vmatpush.msra.mxu0 %v346
        %367 = vmatmul.f32.gmra.mxu0 %v349
        %v368 = vpop.f32.mrf.mxu0
        %v369 = vadd.f32 0.0, %v368
        %370 = vdwg.mxu0
        %v371 = vrcp.pop %v344
        %v372 = vmul.f32 %v369, %v371
        %v373 = vld [vmem:[#allocation2] sm:$0xff]
        %v374 = vrcp.pop %v344
        %v375 = vmul.f32 %v344, %v374
        %v376 = vsub.f32 1.0, %v375
        %v377 = vmul.f32 %v374, %v376
        %v378 = vadd.f32 %v374, %v377
        %vm379 = vweird.f32 %v344
        %vm380 = vweird.f32 %v374
        %vm381 = vmor %vm379, %vm380
        %v382 = vsel %vm381, %v374, %v378
        %v383 = vand.u32 2147483647, %v344
        %vm384 = vcmp.eq.f32.partialorder %v383, 8.507059e+37
        %v385 = vand.u32 %v344, 2147483648
        %v386 = vor.u32 1.1754944e-38, %v385
        %v387 = vsel %vm384, %v386, %v382
        %v388 = vmul.f32 %v341, %v387
        %v389 = vadd.f32 %v388, 0.0
        %390 = vrot.lane.b32.xlu0 %v306, 120
        %v391 = vpop.permute.xlu0 %390
        %392 = vrot.lane.b32.xlu0 %v306, 88
        %v393 = vpop.permute.xlu0 %392
        %v394 = vsel %vm311, %v391, 0
        %v396 = vsel %vm311, %v393, 0
        %398 = vmatpush.xpose.msra.mxu0 0.0
        %399 = vmatpush.xpose.msra.mxu0 0.0
        %400 = vmatpush.xpose.msra.mxu0 0.0
        %401 = vmatpush.xpose.msra.mxu0 0.0
        %402 = vmatpush.xpose.msra.mxu0 0.0
        %403 = vmatpush.xpose.msra.mxu0 0.0
        %404 = vmatpush.xpose.msra.mxu0 0.0
        %405 = vmatpush.xpose.msra.mxu0 0.0
        %406 = vmatpush.xpose.msra.mxu0 0.0
        %407 = vmatpush.xpose.msra.mxu0 0.0
        %408 = vmatpush.xpose.msra.mxu0 0.0
        %409 = vmatpush.xpose.msra.mxu0 0.0
        %410 = vmatpush.xpose.msra.mxu0 0.0
        %411 = vmatpush.xpose.msra.mxu0 0.0
        %412 = vmatpush.xpose.msra.mxu0 0.0
        %413 = vmatpush.xpose.msra.mxu0 %v396
        %414 = vmatmul.f32.gmra.mxu0 %v394
        %v415 = vpop.f32.mrf.mxu0
        %v416 = vadd.f32 0.0, %v415
        %417 = vdwg.mxu0
        %v418 = vsel %vm311, %v416, -inf
        %419 = vmax.xlane.f32.xlu0 %v418
        %v420 = vpop.xlane.xlu0 %419
        %v421 = vsub.f32 %v416, %v420
        %v422 = vmul.f32 %v421, 1.442695
        %v423 = vpow.pop %v422
        %v424 = vsel %vm311, %v423, 0.0
        %425 = vadd.xlane.f32.xlu0 %v424
        %v426 = vpop.xlane.xlu0 %425
        %427 = vrot.lane.b32.xlu0 %v306, 56
        %v428 = vpop.permute.xlu0 %427
        %v431 = vsel %vm311, %v423, 0
        %433 = vmatpush.msra.mxu0 0.0
        %434 = vmatpush.msra.mxu0 0.0
        %435 = vmatpush.msra.mxu0 0.0
        %436 = vmatpush.msra.mxu0 0.0
        %437 = vmatpush.msra.mxu0 0.0
        %438 = vmatpush.msra.mxu0 0.0
        %439 = vmatpush.msra.mxu0 0.0
        %440 = vmatpush.msra.mxu0 0.0
        %441 = vmatpush.msra.mxu0 0.0
        %442 = vmatpush.msra.mxu0 0.0
        %443 = vmatpush.msra.mxu0 0.0
        %444 = vmatpush.msra.mxu0 0.0
        %445 = vmatpush.msra.mxu0 0.0
        %446 = vmatpush.msra.mxu0 0.0
        %447 = vmatpush.msra.mxu0 0.0
        %448 = vmatpush.msra.mxu0 %v428
        %449 = vmatmul.f32.gmra.mxu0 %v431
        %v450 = vpop.f32.mrf.mxu0
        %v451 = vadd.f32 0.0, %v450
        %452 = vdwg.mxu0
        %v453 = vrcp.pop %v426
        %v454 = vmul.f32 %v451, %v453
        %v455 = vld [vmem:[#allocation2 + $0x8] sm:$0xff]
        %v457 = vsel %vm311, %v454, 0
        %459 = vmatpush.msra.mxu0 0.0
        %460 = vmatpush.msra.mxu0 0.0
        %461 = vmatpush.msra.mxu0 0.0
        %462 = vmatpush.msra.mxu0 0.0
        %463 = vmatpush.msra.mxu0 0.0
        %464 = vmatpush.msra.mxu0 0.0
        %465 = vmatpush.msra.mxu0 0.0
        %466 = vmatpush.msra.mxu0 0.0
        %467 = vmatpush.msra.mxu0 0.0
        %468 = vmatpush.msra.mxu0 0.0
        %469 = vmatpush.msra.mxu0 0.0
        %470 = vmatpush.msra.mxu0 0.0
        %471 = vmatpush.msra.mxu0 0.0
        %472 = vmatpush.msra.mxu0 0.0
        %473 = vmatpush.msra.mxu0 0.0
        %474 = vmatpush.msra.mxu0 %v455
        %475 = vmatmul.f32.gmra.mxu0 %v457
        %v476 = vpop.f32.mrf.mxu0
        %v477 = vadd.f32 0.0, %v476
        %478 = vdwg.mxu0
        %v480 = vsel %vm311, %v372, 0
        %482 = vmatpush.msra.mxu0 0.0
        %483 = vmatpush.msra.mxu0 0.0
        %484 = vmatpush.msra.mxu0 0.0
        %485 = vmatpush.msra.mxu0 0.0
        %486 = vmatpush.msra.mxu0 0.0
        %487 = vmatpush.msra.mxu0 0.0
        %488 = vmatpush.msra.mxu0 0.0
        %489 = vmatpush.msra.mxu0 0.0
        %490 = vmatpush.msra.mxu0 0.0
        %491 = vmatpush.msra.mxu0 0.0
        %492 = vmatpush.msra.mxu0 0.0
        %493 = vmatpush.msra.mxu0 0.0
        %494 = vmatpush.msra.mxu0 0.0
        %495 = vmatpush.msra.mxu0 0.0
        %496 = vmatpush.msra.mxu0 0.0
        %497 = vmatpush.msra.mxu0 %v373
        %498 = vmatmul.f32.gmra.mxu0 %v480
        %v499 = vpop.f32.mrf.mxu0
        %v500 = vadd.f32 %v477, %v499
        %501 = vdwg.mxu0
        %v502 = vrcp.pop %v426
        %v503 = vmul.f32 %v426, %v502
        %v504 = vsub.f32 1.0, %v503
        %v505 = vmul.f32 %v502, %v504
        %v506 = vadd.f32 %v502, %v505
        %vm507 = vweird.f32 %v426
        %vm508 = vweird.f32 %v502
        %vm509 = vmor %vm507, %vm508
        %v510 = vsel %vm509, %v502, %v506
        %v511 = vand.u32 2147483647, %v426
        %vm512 = vcmp.eq.f32.partialorder %v511, 8.507059e+37
        %v513 = vand.u32 %v426, 2147483648
        %v514 = vor.u32 1.1754944e-38, %v513
        %v515 = vsel %vm512, %v514, %v510
        %v516 = vmul.f32 %v423, %v515
        %v517 = vadd.f32 %v389, %v516
        %518 = vrot.lane.b32.xlu0 %v306, 112
        %v519 = vpop.permute.xlu0 %518
        %520 = vrot.lane.b32.xlu0 %v306, 80
        %v521 = vpop.permute.xlu0 %520
        %v522 = vsel %vm311, %v519, 0
        %v524 = vsel %vm311, %v521, 0
        %526 = vmatpush.xpose.msra.mxu0 0.0
        %527 = vmatpush.xpose.msra.mxu0 0.0
        %528 = vmatpush.xpose.msra.mxu0 0.0
        %529 = vmatpush.xpose.msra.mxu0 0.0
        %530 = vmatpush.xpose.msra.mxu0 0.0
        %531 = vmatpush.xpose.msra.mxu0 0.0
        %532 = vmatpush.xpose.msra.mxu0 0.0
        %533 = vmatpush.xpose.msra.mxu0 0.0
        %534 = vmatpush.xpose.msra.mxu0 0.0
        %535 = vmatpush.xpose.msra.mxu0 0.0
        %536 = vmatpush.xpose.msra.mxu0 0.0
        %537 = vmatpush.xpose.msra.mxu0 0.0
        %538 = vmatpush.xpose.msra.mxu0 0.0
        %539 = vmatpush.xpose.msra.mxu0 0.0
        %540 = vmatpush.xpose.msra.mxu0 0.0
        %541 = vmatpush.xpose.msra.mxu0 %v524
        %542 = vmatmul.f32.gmra.mxu0 %v522
        %v543 = vpop.f32.mrf.mxu0
        %v544 = vadd.f32 0.0, %v543
        %545 = vdwg.mxu0
        %v546 = vsel %vm311, %v544, -inf
        %547 = vmax.xlane.f32.xlu0 %v546
        %v548 = vpop.xlane.xlu0 %547
        %v549 = vsub.f32 %v544, %v548
        %v550 = vmul.f32 %v549, 1.442695
        %v551 = vpow.pop %v550
        %v552 = vsel %vm311, %v551, 0.0
        %553 = vadd.xlane.f32.xlu0 %v552
        %v554 = vpop.xlane.xlu0 %553
        %555 = vrot.lane.b32.xlu0 %v306, 48
        %v556 = vpop.permute.xlu0 %555
        %v559 = vsel %vm311, %v551, 0
        %561 = vmatpush.msra.mxu0 0.0
        %562 = vmatpush.msra.mxu0 0.0
        %563 = vmatpush.msra.mxu0 0.0
        %564 = vmatpush.msra.mxu0 0.0
        %565 = vmatpush.msra.mxu0 0.0
        %566 = vmatpush.msra.mxu0 0.0
        %567 = vmatpush.msra.mxu0 0.0
        %568 = vmatpush.msra.mxu0 0.0
        %569 = vmatpush.msra.mxu0 0.0
        %570 = vmatpush.msra.mxu0 0.0
        %571 = vmatpush.msra.mxu0 0.0
        %572 = vmatpush.msra.mxu0 0.0
        %573 = vmatpush.msra.mxu0 0.0
        %574 = vmatpush.msra.mxu0 0.0
        %575 = vmatpush.msra.mxu0 0.0
        %576 = vmatpush.msra.mxu0 %v556
        %577 = vmatmul.f32.gmra.mxu0 %v559
        %v578 = vpop.f32.mrf.mxu0
        %v579 = vadd.f32 0.0, %v578
        %580 = vdwg.mxu0
        %v581 = vrcp.pop %v554
        %v582 = vmul.f32 %v579, %v581
        %v583 = vld [vmem:[#allocation2 + $0x10] sm:$0xff]
        %v585 = vsel %vm311, %v582, 0
        %587 = vmatpush.msra.mxu0 0.0
        %588 = vmatpush.msra.mxu0 0.0
        %589 = vmatpush.msra.mxu0 0.0
        %590 = vmatpush.msra.mxu0 0.0
        %591 = vmatpush.msra.mxu0 0.0
        %592 = vmatpush.msra.mxu0 0.0
        %593 = vmatpush.msra.mxu0 0.0
        %594 = vmatpush.msra.mxu0 0.0
        %595 = vmatpush.msra.mxu0 0.0
        %596 = vmatpush.msra.mxu0 0.0
        %597 = vmatpush.msra.mxu0 0.0
        %598 = vmatpush.msra.mxu0 0.0
        %599 = vmatpush.msra.mxu0 0.0
        %600 = vmatpush.msra.mxu0 0.0
        %601 = vmatpush.msra.mxu0 0.0
        %602 = vmatpush.msra.mxu0 %v583
        %603 = vmatmul.f32.gmra.mxu0 %v585
        %v604 = vpop.f32.mrf.mxu0
        %v605 = vadd.f32 0.0, %v604
        %606 = vdwg.mxu0
        %v607 = vadd.f32 %v500, %v605
        %v608 = vrcp.pop %v554
        %v609 = vmul.f32 %v554, %v608
        %v610 = vsub.f32 1.0, %v609
        %v611 = vmul.f32 %v608, %v610
        %v612 = vadd.f32 %v608, %v611
        %vm613 = vweird.f32 %v554
        %vm614 = vweird.f32 %v608
        %vm615 = vmor %vm613, %vm614
        %v616 = vsel %vm615, %v608, %v612
        %v617 = vand.u32 2147483647, %v554
        %vm618 = vcmp.eq.f32.partialorder %v617, 8.507059e+37
        %v619 = vand.u32 %v554, 2147483648
        %v620 = vor.u32 1.1754944e-38, %v619
        %v621 = vsel %vm618, %v620, %v616
        %v622 = vmul.f32 %v551, %v621
        %v623 = vadd.f32 %v517, %v622
        %624 = vrot.lane.b32.xlu0 %v306, 104
        %v625 = vpop.permute.xlu0 %624
        %626 = vrot.lane.b32.xlu0 %v306, 72
        %v627 = vpop.permute.xlu0 %626
        %v628 = vsel %vm311, %v625, 0
        %v630 = vsel %vm311, %v627, 0
        %632 = vmatpush.xpose.msra.mxu0 0.0
        %633 = vmatpush.xpose.msra.mxu0 0.0
        %634 = vmatpush.xpose.msra.mxu0 0.0
        %635 = vmatpush.xpose.msra.mxu0 0.0
        %636 = vmatpush.xpose.msra.mxu0 0.0
        %637 = vmatpush.xpose.msra.mxu0 0.0
        %638 = vmatpush.xpose.msra.mxu0 0.0
        %639 = vmatpush.xpose.msra.mxu0 0.0
        %640 = vmatpush.xpose.msra.mxu0 0.0
        %641 = vmatpush.xpose.msra.mxu0 0.0
        %642 = vmatpush.xpose.msra.mxu0 0.0
        %643 = vmatpush.xpose.msra.mxu0 0.0
        %644 = vmatpush.xpose.msra.mxu0 0.0
        %645 = vmatpush.xpose.msra.mxu0 0.0
        %646 = vmatpush.xpose.msra.mxu0 0.0
        %647 = vmatpush.xpose.msra.mxu0 %v630
        %648 = vmatmul.f32.gmra.mxu0 %v628
        %v649 = vpop.f32.mrf.mxu0
        %v650 = vadd.f32 0.0, %v649
        %651 = vdwg.mxu0
        %v652 = vsel %vm311, %v650, -inf
        %653 = vmax.xlane.f32.xlu0 %v652
        %v654 = vpop.xlane.xlu0 %653
        %v655 = vsub.f32 %v650, %v654
        %v656 = vmul.f32 %v655, 1.442695
        %v657 = vpow.pop %v656
        %v658 = vsel %vm311, %v657, 0.0
        %659 = vadd.xlane.f32.xlu0 %v658
        %v660 = vpop.xlane.xlu0 %659
        %661 = vrot.lane.b32.xlu0 %v306, 40
        %v662 = vpop.permute.xlu0 %661
        %v665 = vsel %vm311, %v657, 0
        %667 = vmatpush.msra.mxu0 0.0
        %668 = vmatpush.msra.mxu0 0.0
        %669 = vmatpush.msra.mxu0 0.0
        %670 = vmatpush.msra.mxu0 0.0
        %671 = vmatpush.msra.mxu0 0.0
        %672 = vmatpush.msra.mxu0 0.0
        %673 = vmatpush.msra.mxu0 0.0
        %674 = vmatpush.msra.mxu0 0.0
        %675 = vmatpush.msra.mxu0 0.0
        %676 = vmatpush.msra.mxu0 0.0
        %677 = vmatpush.msra.mxu0 0.0
        %678 = vmatpush.msra.mxu0 0.0
        %679 = vmatpush.msra.mxu0 0.0
        %680 = vmatpush.msra.mxu0 0.0
        %681 = vmatpush.msra.mxu0 0.0
        %682 = vmatpush.msra.mxu0 %v662
        %683 = vmatmul.f32.gmra.mxu0 %v665
        %v684 = vpop.f32.mrf.mxu0
        %v685 = vadd.f32 0.0, %v684
        %686 = vdwg.mxu0
        %v687 = vrcp.pop %v660
        %v688 = vmul.f32 %v685, %v687
        %v689 = vld [vmem:[#allocation2 + $0x18] sm:$0xff]
        %v691 = vsel %vm311, %v688, 0
        %693 = vmatpush.msra.mxu0 0.0
        %694 = vmatpush.msra.mxu0 0.0
        %695 = vmatpush.msra.mxu0 0.0
        %696 = vmatpush.msra.mxu0 0.0
        %697 = vmatpush.msra.mxu0 0.0
        %698 = vmatpush.msra.mxu0 0.0
        %699 = vmatpush.msra.mxu0 0.0
        %700 = vmatpush.msra.mxu0 0.0
        %701 = vmatpush.msra.mxu0 0.0
        %702 = vmatpush.msra.mxu0 0.0
        %703 = vmatpush.msra.mxu0 0.0
        %704 = vmatpush.msra.mxu0 0.0
        %705 = vmatpush.msra.mxu0 0.0
        %706 = vmatpush.msra.mxu0 0.0
        %707 = vmatpush.msra.mxu0 0.0
        %708 = vmatpush.msra.mxu0 %v689
        %709 = vmatmul.f32.gmra.mxu0 %v691
        %v710 = vpop.f32.mrf.mxu0
        %v711 = vadd.f32 0.0, %v710
        %712 = vdwg.mxu0
        %v713 = vadd.f32 %v607, %v711
        %v714 = vrcp.pop %v660
        %v715 = vmul.f32 %v660, %v714
        %v716 = vsub.f32 1.0, %v715
        %v717 = vmul.f32 %v714, %v716
        %v718 = vadd.f32 %v714, %v717
        %vm719 = vweird.f32 %v660
        %vm720 = vweird.f32 %v714
        %vm721 = vmor %vm719, %vm720
        %v722 = vsel %vm721, %v714, %v718
        %v723 = vand.u32 2147483647, %v660
        %vm724 = vcmp.eq.f32.partialorder %v723, 8.507059e+37
        %v725 = vand.u32 %v660, 2147483648
        %v726 = vor.u32 1.1754944e-38, %v725
        %v727 = vsel %vm724, %v726, %v722
        %v728 = vmul.f32 %v657, %v727
        %v729 = vadd.f32 %v623, %v728
        %v730 = vld [vmem:[%s4] sm:$0x1]
        %v732 = vperm.slane %v730, 0
        %v734 = vadd.f32 %v713, %v732
        %735 = vst.msk [vmem:[%s274] sm:$0xff] %vm284, %v734
        %v736 = vmul.f32 %v729, 0.25
        %737 = vst.msk [vmem:[%s266] sm:$0xff] %vm311, %v736
        %p738 = scmp.lt.s32.totalorder %s22, 1
        %s739 = scalar_select %p738, %s22, 1
        %s740 = smul.addr %s739, 8
        %s741 = scalar_lea.vmem %s5, %s740
        %s742 = sand.u32 %s166, 1
        %s743 = scalar_lea.sflag [#allocation4], %s742
        %s744 = sand.u32 %s166, 1
        %s745 = smul.addr %s744, 8
        %s746 = scalar_lea.vmem [#allocation5], %s745
        // Predicated region
        $region45: #{qmha_forward.1} parent=39 // pred_check
          %p747 = pneg %p150
        $region46: #{qmha_forward.1} parent=39 // pred_check_branch
          %749 = sbr.rel (%p747) target = $region48
        $region47: #{qmha_forward.1} parent=39 // pred_region
          _
        $region48: #{qmha_forward.1} parent=39 // pred_fallthru
          _
        // Predicated region
        $region49: #{qmha_forward.1} parent=39 // pred_check
          %p750 = pneg %p176
        $region50: #{qmha_forward.1} parent=39 // pred_check_branch
          %752 = sbr.rel (%p750) target = $region52
        $region51: #{qmha_forward.1} parent=39 // pred_region
          %754 = vsyncadd %s743, 0
          %s755 = smul.addr %s22, 8
          %s756 = scalar_lea.hbm %s6, %s755
          %s758 = sshll.u32 %s746, 4
          %s759 = int_to_ptr.vmem [resolvable:$true] %s758
          %s760 = sshll.u32 %s756, 4
          %s761 = int_to_ptr.hbm [resolvable:$true] %s760
          %763 = dma.vmem_to_hbm [thread:$0]  %s759, 128, %s761, %s743
        $region52: #{qmha_forward.1} parent=39 // pred_fallthru
          _
      $region40: #{qmha_forward.1} parent=5 // pred_fallthru
        _
      %p764 = scmp.le.s32.totalorder 2, %s17
      // Predicated region
      $region53: #{qmha_forward.1} parent=5 // pred_check
        %p765 = pneg %p764
      $region54: #{qmha_forward.1} parent=5 // pred_check_branch
        %767 = sbr.rel (%p765) target = $region56
      $region55: #{qmha_forward.1} parent=5 // pred_region
        %s768 = ssub.s32 %s17, 2
        // Predicated region
        $region57: #{qmha_forward.1} parent=55 // pred_check
          %p769 = pneg %p156
        $region58: #{qmha_forward.1} parent=55 // pred_check_branch
          %771 = sbr.rel (%p769) target = $region60
        $region59: #{qmha_forward.1} parent=55 // pred_region
          %p772 = scmp.lt.s32.totalorder %s23, 1
          %s773 = scalar_select %p772, %s23, 1
          %s774 = smul.addr %s773, 8
          %s775 = scalar_lea.vmem %s5, %s774
        $region60: #{qmha_forward.1} parent=55 // pred_fallthru
          _
        // Predicated region
        $region61: #{qmha_forward.1} parent=55 // pred_check
          %p776 = pneg %p182
        $region62: #{qmha_forward.1} parent=55 // pred_check_branch
          %778 = sbr.rel (%p776) target = $region64
        $region63: #{qmha_forward.1} parent=55 // pred_region
          %s779 = sand.u32 %s167, 1
          %s780 = scalar_lea.sflag [#allocation4], %s779
          %s781 = sand.u32 %s167, 1
          %s782 = smul.addr %s781, 8
          %s783 = scalar_lea.vmem [#allocation5], %s782
          %785 = dma.done %s780, 128
        $region64: #{qmha_forward.1} parent=55 // pred_fallthru
          _
      $region56: #{qmha_forward.1} parent=5 // pred_fallthru
        _
    $region6: #{qmha_forward.1} parent=1 // loop_footer
      %s21 = sadd.s32 1, %s17
    $region7: #{qmha_forward.1} parent=1 // loop_footer_branch
      %16 = sbr.rel target = $region3
    $region8: #{qmha_forward.1} parent=1 // loop_exit
      _
    %786 = vsyncpa [#allocation3], 1
    %s787 = scalar_lea.sflag [#allocation3], 1
    %788 = vsyncpa %s787, 1
    %789 = vsyncpa [#allocation4], 1
    %s790 = scalar_lea.sflag [#allocation4], 1
    %791 = vsyncpa %s790, 1

</llo_original>
